<compile_context>
chip_gen: v7x
topology: tpu7x:2x2x1
jax: 0.10.0
libtpu: 0.0.40
codegen_flags: <defaults>
</compile_context>

<pallas_src>
import jax
import jax.numpy as jnp
from jax import lax
from jax.experimental import pallas as pl
from jax.experimental.pallas import tpu as pltpu

EPS = 1e-5  # PyTorch BatchNorm1d default eps


def _round_up(x, m):
    return (x + m - 1) // m * m


def _vmem_capacity_bytes():
    try:
        return int(pltpu.get_tpu_info().vmem_capacity_bytes)
    except Exception:
        return 64 << 20  # conservative default (v7x per-TC VMEM)


def residual_block(x, w1, b1, gamma, beta, w2, b2, *,
                   mm_dtype=jnp.bfloat16, max_batch_tile=1024,
                   force_two_pass=False):
    """x: (B, F) float32. w1, w2: (F, F) as (in, out). Vectors: (F,) or (1, F)."""
    B, F = x.shape
    b1, b2, gamma, beta = (jnp.reshape(v, (1, F)) for v in (b1, b2, gamma, beta))

    Fp = _round_up(F, 128)                       # lane-dense feature padding
    mm_bytes = jnp.dtype(mm_dtype).itemsize
    cap = _vmem_capacity_bytes()
    inv_B = 1.0 / B                              # stats use the REAL batch size

    def pad2(a, rows, cols, dtype=None):
        a = jnp.pad(a, ((0, rows - a.shape[0]), (0, cols - a.shape[1])))
        return a if dtype is None else a.astype(dtype)

    # ------------------------------------------------------------------
    # Fused single-kernel fast path (whole problem resident in VMEM).
    # ------------------------------------------------------------------
    B8 = _round_up(B, 8)
    fused_bytes = (4 * B8 * Fp * 4              # x, out, h, hn (f32)
                   + 2 * Fp * Fp * mm_bytes     # w1, w2
                   + 16 * Fp * 4 + (2 << 20))   # vectors + slack
    if (not force_two_pass) and fused_bytes <= int(0.4 * cap):
        xp = pad2(x.astype(jnp.float32), B8, Fp)
        w1p = pad2(w1, Fp, Fp, mm_dtype)
        w2p = pad2(w2, Fp, Fp, mm_dtype)
        b1p, b2p = pad2(b1, 1, Fp), pad2(b2, 1, Fp)
        gp, btp = pad2(gamma, 1, Fp), pad2(beta, 1, Fp)
        mask_rows = B8 != B

        def fused_kernel(x_ref, w1_ref, b1_ref, g_ref, bt_ref, w2_ref, b2_ref,
                         o_ref):
            xv = x_ref[...]
            h = jnp.dot(xv.astype(mm_dtype), w1_ref[...],
                        preferred_element_type=jnp.float32) + b1_ref[...]
            h = jnp.maximum(h, 0.0)
            if mask_rows:
                row = lax.broadcasted_iota(jnp.int32, (B8, 1), 0)
                valid = row < B
                mean = jnp.sum(jnp.where(valid, h, 0.0),
                               axis=0, keepdims=True) * inv_B
                d = jnp.where(valid, h - mean, 0.0)
            else:
                mean = jnp.sum(h, axis=0, keepdims=True) * inv_B
                d = h - mean
            var = jnp.sum(d * d, axis=0, keepdims=True) * inv_B  # exact centered
            scale = g_ref[...] * lax.rsqrt(var + EPS)
            shift = bt_ref[...] - mean * scale
            hn = h * scale + shift
            y = jnp.dot(hn.astype(mm_dtype), w2_ref[...],
                        preferred_element_type=jnp.float32) + b2_ref[...]
            o_ref[...] = jnp.maximum(xv + y, 0.0)

        out_p = pl.pallas_call(
            fused_kernel,
            out_shape=jax.ShapeDtypeStruct((B8, Fp), jnp.float32),
            compiler_params=pltpu.CompilerParams(
                vmem_limit_bytes=min(cap, max(32 << 20, int(1.5 * fused_bytes)))),
        )(xp, w1p, b1p, gp, btp, w2p, b2p)
        return out_p[:B, :F]

    # ------------------------------------------------------------------
    # Two-pass batch-tiled path.
    # ------------------------------------------------------------------
    def pass2_footprint(tb):
        # pass 2 dominates: x(f32) + out(f32) + h(mm) streamed (double-buffered)
        # plus the resident w2 and small vectors.
        streamed = tb * Fp * (2 * 4 + 2 * 4 + 2 * mm_bytes)
        return streamed + Fp * Fp * mm_bytes + 64 * Fp * 4 + (2 << 20)

    TB = max(8, min(_round_up(max_batch_tile, 8), _round_up(B, 8)))
    while TB > 8 and pass2_footprint(TB) > int(0.7 * cap):
        TB = max(8, _round_up(TB // 2, 8))
    Bp = _round_up(B, TB)
    n_tiles = Bp // TB
    need_mask = Bp != B
    vmem_limit = min(cap, max(32 << 20, int(1.3 * pass2_footprint(TB))))

    xp_f32 = pad2(x.astype(jnp.float32), Bp, Fp)   # residual stream (pass 2)
    xp_mm = xp_f32.astype(mm_dtype)                # matmul stream (pass 1)
    w1p = pad2(w1, Fp, Fp, mm_dtype)
    w2p = pad2(w2, Fp, Fp, mm_dtype)
    b1p, b2p = pad2(b1, 1, Fp), pad2(b2, 1, Fp)
    gp, btp = pad2(gamma, 1, Fp), pad2(beta, 1, Fp)

    def run_two_pass(resident):
        # ---- pass 1: h = relu(x @ w1 + b1); per-feature sum / sumsq ----
        def pass1_kernel(x_ref, w1_ref, b1_ref, h_ref, s_ref, ss_ref):
            i = pl.program_id(0)

            @pl.when(i == 0)
            def _():
                s_ref[...] = jnp.zeros_like(s_ref)
                ss_ref[...] = jnp.zeros_like(ss_ref)

            h = jnp.dot(x_ref[...], w1_ref[...],
                        preferred_element_type=jnp.float32) + b1_ref[...]
            h = jnp.maximum(h, 0.0)
            h_ref[...] = h.astype(h_ref.dtype)   # bf16 inter-pass storage

            def accum(hv):
                s_ref[...] += jnp.sum(hv, axis=0, keepdims=True)
                ss_ref[...] += jnp.sum(hv * hv, axis=0, keepdims=True)

            if need_mask:
                # Only the last tile contains padded rows: mask only there.
                @pl.when(i == n_tiles - 1)
                def _():
                    row = i * TB + lax.broadcasted_iota(jnp.int32, (TB, 1), 0)
                    accum(jnp.where(row < B, h, 0.0))

                @pl.when(i < n_tiles - 1)
                def _():
                    accum(h)
            else:
                accum(h)

        h, s, ss = pl.pallas_call(
            pass1_kernel,
            out_shape=(
                jax.ShapeDtypeStruct((Bp, Fp), mm_dtype),
                jax.ShapeDtypeStruct((1, Fp), jnp.float32),
                jax.ShapeDtypeStruct((1, Fp), jnp.float32),
            ),
            grid_spec=pltpu.PrefetchScalarGridSpec(
                num_scalar_prefetch=0,
                grid=(n_tiles,),
                in_specs=[
                    pl.BlockSpec((TB, Fp), lambda i: (i, 0)),             # x (bf16 stream)
                    pl.BlockSpec((Fp, Fp), lambda i: (0, 0), **resident),  # w1 resident
                    pl.BlockSpec((1, Fp), lambda i: (0, 0), **resident),   # b1
                ],
                out_specs=[
                    pl.BlockSpec((TB, Fp), lambda i: (i, 0)),   # h tile
                    pl.BlockSpec((1, Fp), lambda i: (0, 0)),    # sum accumulator
                    pl.BlockSpec((1, Fp), lambda i: (0, 0)),    # sumsq accumulator
                ],
            ),
            compiler_params=pltpu.CompilerParams(
                dimension_semantics=("arbitrary",),   # cross-tile stats reduction
                vmem_limit_bytes=vmem_limit,
            ),
        )(xp_mm, w1p, b1p)

        # ---- pass 2: fold stats -> scale/shift, normalize, linear2, residual ----
        def pass2_kernel(x_ref, h_ref, s_ref, ss_ref, g_ref, bt_ref, w2_ref,
                         b2_ref, o_ref):
            mean = s_ref[...] * inv_B
            # TODO(synk): E[h^2]-mean^2 can lose precision at very large B; a
            # shifted / Welford-style accumulation would be more robust.
            var = jnp.maximum(ss_ref[...] * inv_B - mean * mean, 0.0)
            scale = g_ref[...] * lax.rsqrt(var + EPS)
            shift = bt_ref[...] - mean * scale
            hn = h_ref[...].astype(jnp.float32) * scale + shift
            y = jnp.dot(hn.astype(mm_dtype), w2_ref[...],
                        preferred_element_type=jnp.float32) + b2_ref[...]
            o_ref[...] = jnp.maximum(x_ref[...] + y, 0.0)

        out_p = pl.pallas_call(
            pass2_kernel,
            out_shape=jax.ShapeDtypeStruct((Bp, Fp), jnp.float32),
            grid_spec=pltpu.PrefetchScalarGridSpec(
                num_scalar_prefetch=0,
                grid=(n_tiles,),
                in_specs=[
                    pl.BlockSpec((TB, Fp), lambda i: (i, 0)),              # x (residual)
                    pl.BlockSpec((TB, Fp), lambda i: (i, 0)),              # h (bf16)
                    pl.BlockSpec((1, Fp), lambda i: (0, 0), **resident),   # sum
                    pl.BlockSpec((1, Fp), lambda i: (0, 0), **resident),   # sumsq
                    pl.BlockSpec((1, Fp), lambda i: (0, 0), **resident),   # gamma
                    pl.BlockSpec((1, Fp), lambda i: (0, 0), **resident),   # beta
                    pl.BlockSpec((Fp, Fp), lambda i: (0, 0), **resident),  # w2 resident
                    pl.BlockSpec((1, Fp), lambda i: (0, 0), **resident),   # b2
                ],
                out_specs=pl.BlockSpec((TB, Fp), lambda i: (i, 0)),
            ),
            compiler_params=pltpu.CompilerParams(
                dimension_semantics=("parallel",),   # independent tiles -> megacore
                vmem_limit_bytes=vmem_limit,
            ),
        )(xp_f32, h, s, ss, gp, btp, w2p, b2p)
        return out_p[:B, :F]

    try:
        # Single-buffer the grid-resident constants (no wasted 2nd VMEM buffer).
        return run_two_pass(dict(pipeline_mode=pl.Buffered(1)))
    except Exception:
        # Fallback for JAX builds that reject the single-buffering hint.
        return run_two_pass({})


def reference(x, w1, b1, gamma, beta, w2, b2):
    h = jnp.maximum(x @ w1 + b1, 0.0)
    mean = jnp.mean(h, axis=0, keepdims=True)
    var = jnp.mean((h - mean) ** 2, axis=0, keepdims=True)
    h = gamma * (h - mean) / jnp.sqrt(var + EPS) + beta
    h = h @ w2 + b2
    return jnp.maximum(x + h, 0.0)


def _make_inputs(key, B, F):
    kx, kw1, kb1, kw2, kb2 = jax.random.split(key, 5)
    x = jax.random.normal(kx, (B, F), dtype=jnp.float32)
    bound = 1.0 / (F ** 0.5)
    w1 = jax.random.uniform(kw1, (F, F), jnp.float32, -bound, bound)
    b1 = jax.random.uniform(kb1, (1, F), jnp.float32, -bound, bound)
    w2 = jax.random.uniform(kw2, (F, F), jnp.float32, -bound, bound)
    b2 = jax.random.uniform(kb2, (1, F), jnp.float32, -bound, bound)
    gamma = jnp.ones((1, F), jnp.float32)
    beta = jnp.zeros((1, F), jnp.float32)
    return x, w1, b1, gamma, beta, w2, b2


if __name__ == "__main__":
    key = jax.random.PRNGKey(0)
    k_small, k_big = jax.random.split(key)

    # --- small demo shapes (fused single-kernel path) ---
    args_s = _make_inputs(k_small, 8, 32)
    ref_s = reference(*args_s)

    out_f32 = jax.block_until_ready(
        residual_block(*args_s, mm_dtype=jnp.float32))
    assert out_f32.shape == (8, 32)
    assert jnp.allclose(out_f32, ref_s, atol=1e-4, rtol=1e-4)

    out_bf16 = jax.block_until_ready(
        residual_block(*args_s, mm_dtype=jnp.bfloat16))
    assert out_bf16.shape == (8, 32)
    assert jnp.allclose(out_bf16, ref_s, atol=5e-2, rtol=5e-2)

    # --- forced two-pass batch-tiled path (multi-tile + padded-row masking) ---
    args_b = _make_inputs(k_big, 200, 96)
    ref_b = reference(*args_b)

    out2_f32 = jax.block_until_ready(
        residual_block(*args_b, mm_dtype=jnp.float32,
                       max_batch_tile=64, force_two_pass=True))
    assert out2_f32.shape == (200, 96)
    assert jnp.allclose(out2_f32, ref_b, atol=5e-4, rtol=5e-4)

    out2_bf16 = jax.block_until_ready(
        residual_block(*args_b, mm_dtype=jnp.bfloat16,
                       max_batch_tile=64, force_two_pass=True))
    assert out2_bf16.shape == (200, 96)
    assert jnp.allclose(out2_bf16, ref_b, atol=5e-2, rtol=5e-2)

    print("KERNEL_OK")
</pallas_src>

<mosaic_0001>
module attributes {stable_mosaic.version = 11 : i64} {
  func.func @fused_kernel(%arg0: memref<8x128xf32, #tpu.memory_space<vmem>>, %arg1: memref<128x128xf32, #tpu.memory_space<vmem>>, %arg2: memref<1x128xf32, #tpu.memory_space<vmem>>, %arg3: memref<1x128xf32, #tpu.memory_space<vmem>>, %arg4: memref<1x128xf32, #tpu.memory_space<vmem>>, %arg5: memref<128x128xf32, #tpu.memory_space<vmem>>, %arg6: memref<1x128xf32, #tpu.memory_space<vmem>>, %arg7: memref<8x128xf32, #tpu.memory_space<vmem>>) attributes {dimension_semantics = [], scalar_prefetch = 0 : i64, scratch_operands = 0 : i64, tpu.core_type = #tpu.core_type<tc>} {
    %c0 = arith.constant 0 : index
    %c0_0 = arith.constant 0 : index
    %0 = vector.load %arg0[%c0, %c0_0] : memref<8x128xf32, #tpu.memory_space<vmem>>, vector<8x128xf32>
    %c0_1 = arith.constant 0 : index
    %c0_2 = arith.constant 0 : index
    %1 = vector.load %arg1[%c0_1, %c0_2] : memref<128x128xf32, #tpu.memory_space<vmem>>, vector<128x128xf32>
    %cst = arith.constant dense<0.000000e+00> : vector<8x128xf32>
    %2 = tpu.matmul %0, %1, %cst {dimension_numbers = #tpu.dot_dimension_numbers<[1], [0], [0], [1], [0, 0, 1, 1], [], []>} : vector<8x128xf32>, vector<128x128xf32>, vector<8x128xf32> -> vector<8x128xf32>
    %c0_3 = arith.constant 0 : index
    %c0_4 = arith.constant 0 : index
    %3 = vector.load %arg2[%c0_3, %c0_4] : memref<1x128xf32, #tpu.memory_space<vmem>>, vector<1x128xf32>
    %4 = vector.broadcast %3 : vector<1x128xf32> to vector<8x128xf32>
    %5 = arith.addf %2, %4 : vector<8x128xf32>
    %cst_5 = arith.constant 0.000000e+00 : f32
    %6 = vector.broadcast %cst_5 : f32 to vector<8x128xf32>
    %7 = arith.maximumf %5, %6 : vector<8x128xf32>
    %cst_6 = arith.constant dense<0.000000e+00> : vector<128xf32>
    %8 = vector.multi_reduction <add>, %7, %cst_6 [0] : vector<8x128xf32> to vector<128xf32>
    %9 = vector.shape_cast %8 : vector<128xf32> to vector<1x128xf32>
    %cst_7 = arith.constant 1.250000e-01 : f32
    %10 = vector.broadcast %cst_7 : f32 to vector<1x128xf32>
    %11 = arith.mulf %9, %10 : vector<1x128xf32>
    %12 = vector.broadcast %11 : vector<1x128xf32> to vector<8x128xf32>
    %13 = arith.subf %7, %12 : vector<8x128xf32>
    %14 = arith.mulf %13, %13 : vector<8x128xf32>
    %cst_8 = arith.constant dense<0.000000e+00> : vector<128xf32>
    %15 = vector.multi_reduction <add>, %14, %cst_8 [0] : vector<8x128xf32> to vector<128xf32>
    %16 = vector.shape_cast %15 : vector<128xf32> to vector<1x128xf32>
    %cst_9 = arith.constant 1.250000e-01 : f32
    %17 = vector.broadcast %cst_9 : f32 to vector<1x128xf32>
    %18 = arith.mulf %16, %17 : vector<1x128xf32>
    %c0_10 = arith.constant 0 : index
    %c0_11 = arith.constant 0 : index
    %19 = vector.load %arg3[%c0_10, %c0_11] : memref<1x128xf32, #tpu.memory_space<vmem>>, vector<1x128xf32>
    %cst_12 = arith.constant 9.99999974E-6 : f32
    %20 = vector.broadcast %cst_12 : f32 to vector<1x128xf32>
    %21 = arith.addf %18, %20 : vector<1x128xf32>
    %22 = math.rsqrt %21 : vector<1x128xf32>
    %23 = arith.mulf %19, %22 : vector<1x128xf32>
    %c0_13 = arith.constant 0 : index
    %c0_14 = arith.constant 0 : index
    %24 = vector.load %arg4[%c0_13, %c0_14] : memref<1x128xf32, #tpu.memory_space<vmem>>, vector<1x128xf32>
    %25 = arith.mulf %11, %23 : vector<1x128xf32>
    %26 = arith.subf %24, %25 : vector<1x128xf32>
    %27 = vector.broadcast %23 : vector<1x128xf32> to vector<8x128xf32>
    %28 = arith.mulf %7, %27 : vector<8x128xf32>
    %29 = vector.broadcast %26 : vector<1x128xf32> to vector<8x128xf32>
    %30 = arith.addf %28, %29 : vector<8x128xf32>
    %c0_15 = arith.constant 0 : index
    %c0_16 = arith.constant 0 : index
    %31 = vector.load %arg5[%c0_15, %c0_16] : memref<128x128xf32, #tpu.memory_space<vmem>>, vector<128x128xf32>
    %cst_17 = arith.constant dense<0.000000e+00> : vector<8x128xf32>
    %32 = tpu.matmul %30, %31, %cst_17 {dimension_numbers = #tpu.dot_dimension_numbers<[1], [0], [0], [1], [0, 0, 1, 1], [], []>} : vector<8x128xf32>, vector<128x128xf32>, vector<8x128xf32> -> vector<8x128xf32>
    %c0_18 = arith.constant 0 : index
    %c0_19 = arith.constant 0 : index
    %33 = vector.load %arg6[%c0_18, %c0_19] : memref<1x128xf32, #tpu.memory_space<vmem>>, vector<1x128xf32>
    %34 = vector.broadcast %33 : vector<1x128xf32> to vector<8x128xf32>
    %35 = arith.addf %32, %34 : vector<8x128xf32>
    %36 = arith.addf %0, %35 : vector<8x128xf32>
    %cst_20 = arith.constant 0.000000e+00 : f32
    %37 = vector.broadcast %cst_20 : f32 to vector<8x128xf32>
    %38 = arith.maximumf %36, %37 : vector<8x128xf32>
    %c0_21 = arith.constant 0 : index
    %c0_22 = arith.constant 0 : index
    %39 = vector.load %arg7[%c0_21, %c0_22] : memref<8x128xf32, #tpu.memory_space<vmem>>, vector<8x128xf32>
    tpu.vector_store %arg7[%c0_21, %c0_22], %38 {strides = array<i32>} : memref<8x128xf32, #tpu.memory_space<vmem>>, vector<8x128xf32>,
    return
  }
}

</mosaic_0001>

<llo_original>
// kernel: tpu_custom_call.1
$region0: #{tpu_custom_call.1}
  #allocation0 [shape = 'u32[]', space=smem, size = 0x4, offset = 0x4, fixed_abs, tag = 'smem constant byte address 0x4 - core index']
  #allocation1 [shape = 'u32[144,128]{1,0:T(1,128)}', space=vmem, size = 0x12000, scoped, tag = 'internal scratch']
  %s0 = inlined_call_operand.hbm [shape: f32[8,128], index: 0, kind: input, shape index: {}]
  %s1 = inlined_call_operand.hbm [shape: f32[128,128], index: 1, kind: input, shape index: {}]
  %s2 = inlined_call_operand.vmem [shape: f32[1,128], index: 2, kind: input, shape index: {}]
  %s3 = inlined_call_operand.vmem [shape: f32[1,128], index: 3, kind: input, shape index: {}]
  %s4 = inlined_call_operand.vmem [shape: f32[1,128], index: 4, kind: input, shape index: {}]
  %s5 = inlined_call_operand.hbm [shape: f32[128,128], index: 5, kind: input, shape index: {}]
  %s6 = inlined_call_operand.vmem [shape: f32[1,128], index: 6, kind: input, shape index: {}]
  %s7 = inlined_call_operand.hbm [shape: f32[8,128], index: 7, kind: output, shape index: {}]
  %s8 = sld [smem:[#allocation0]]
  $region50: #{tpu_custom_call.1} parent=0
    _
  %s10 = ssub.s32 1, %s8
  %s11 = scalar_select 0, %s10, %s8
  $region1: #{tpu_custom_call.1} parent=0
    #allocation2 [shape = 'u8[4096]{0}', space=vmem, size = 0x1000, scoped, tag = 'input window, operand 0, single buffered']
    #allocation3 [shape = 's32[1]{0}', space=sflag, size = 0x4, scoped, tag = 'scoped memory for tpu_custom_call.1']
    #allocation4 [shape = 's32[1]{0}', space=sflag, size = 0x4, scoped, tag = 'scoped memory for tpu_custom_call.1']
    #allocation5 [shape = 'u8[65536]{0}', space=vmem, size = 0x10000, scoped, tag = 'input window, operand 1, single buffered']
    #allocation6 [shape = 's32[1]{0}', space=sflag, size = 0x4, scoped, tag = 'scoped memory for tpu_custom_call.1']
    #allocation7 [shape = 'u8[65536]{0}', space=vmem, size = 0x10000, scoped, tag = 'input window, operand 5, single buffered']
    #allocation8 [shape = 'u8[4096]{0}', space=vmem, size = 0x1000, scoped, tag = 'output window, operand 0, single buffered']
    %12 = vsyncpa [#allocation3], 0
    %13 = vsyncpa [#allocation6], 0
    %14 = vsyncpa [#allocation4], 0
    // Predicated region
    $region2: #{tpu_custom_call.1} parent=1 // pred_check
      _
    $region3: #{tpu_custom_call.1} parent=1 // pred_check_branch
      %16 = sbr.rel (0) target = $region5
    $region4: #{tpu_custom_call.1} parent=1 // pred_region
      %s18 = ssub.s32 128, 128
      %19 = vsyncadd [#allocation3], %s18
      %s21 = sshll.u32 [#allocation2], 4
      %s22 = int_to_ptr.vmem [resolvable:$true] %s21
      %24 = dma.hbm_to_vmem [thread:$0]  %s0, 128, %s22, [#allocation3]
    $region5: #{tpu_custom_call.1} parent=1 // pred_fallthru
      _
    // Predicated region
    $region6: #{tpu_custom_call.1} parent=1 // pred_check
      _
    $region7: #{tpu_custom_call.1} parent=1 // pred_check_branch
      %26 = sbr.rel (0) target = $region9
    $region8: #{tpu_custom_call.1} parent=1 // pred_region
      %s28 = ssub.s32 2048, 2048
      %29 = vsyncadd [#allocation6], %s28
      %s30 = sshll.u32 [#allocation5], 4
      %s31 = int_to_ptr.vmem [resolvable:$true] %s30
      %36 = dma.hbm_to_vmem [thread:$0]  %s1, 2048, %s31, [#allocation6], 128, 128, 8
    $region9: #{tpu_custom_call.1} parent=1 // pred_fallthru
      _
    // Predicated region
    $region10: #{tpu_custom_call.1} parent=1 // pred_check
      _
    $region11: #{tpu_custom_call.1} parent=1 // pred_check_branch
      %38 = sbr.rel (0) target = $region13
    $region12: #{tpu_custom_call.1} parent=1 // pred_region
      _
    $region13: #{tpu_custom_call.1} parent=1 // pred_fallthru
      _
    // Predicated region
    $region14: #{tpu_custom_call.1} parent=1 // pred_check
      _
    $region15: #{tpu_custom_call.1} parent=1 // pred_check_branch
      %40 = sbr.rel (0) target = $region17
    $region16: #{tpu_custom_call.1} parent=1 // pred_region
      _
    $region17: #{tpu_custom_call.1} parent=1 // pred_fallthru
      _
    // Predicated region
    $region18: #{tpu_custom_call.1} parent=1 // pred_check
      _
    $region19: #{tpu_custom_call.1} parent=1 // pred_check_branch
      %42 = sbr.rel (0) target = $region21
    $region20: #{tpu_custom_call.1} parent=1 // pred_region
      _
    $region21: #{tpu_custom_call.1} parent=1 // pred_fallthru
      _
    // Predicated region
    $region22: #{tpu_custom_call.1} parent=1 // pred_check
      _
    $region23: #{tpu_custom_call.1} parent=1 // pred_check_branch
      %44 = sbr.rel (0) target = $region25
    $region24: #{tpu_custom_call.1} parent=1 // pred_region
      %s46 = ssub.s32 2048, 2048
      %47 = vsyncadd [#allocation6], %s46
      %s48 = sshll.u32 [#allocation7], 4
      %s49 = int_to_ptr.vmem [resolvable:$true] %s48
      %54 = dma.hbm_to_vmem [thread:$0]  %s5, 2048, %s49, [#allocation6], 128, 128, 8
    $region25: #{tpu_custom_call.1} parent=1 // pred_fallthru
      _
    // Predicated region
    $region26: #{tpu_custom_call.1} parent=1 // pred_check
      _
    $region27: #{tpu_custom_call.1} parent=1 // pred_check_branch
      %56 = sbr.rel (0) target = $region29
    $region28: #{tpu_custom_call.1} parent=1 // pred_region
      _
    $region29: #{tpu_custom_call.1} parent=1 // pred_fallthru
      _
    // Predicated region
    $region30: #{tpu_custom_call.1} parent=1 // pred_check
      _
    $region31: #{tpu_custom_call.1} parent=1 // pred_check_branch
      %58 = sbr.rel (0) target = $region33
    $region32: #{tpu_custom_call.1} parent=1 // pred_region
      %59 = dma.done [#allocation3], 128
    $region33: #{tpu_custom_call.1} parent=1 // pred_fallthru
      _
    // Predicated region
    $region34: #{tpu_custom_call.1} parent=1 // pred_check
      _
    $region35: #{tpu_custom_call.1} parent=1 // pred_check_branch
      %61 = sbr.rel (0) target = $region37
    $region36: #{tpu_custom_call.1} parent=1 // pred_region
      %62 = dma.done [#allocation6], 2048
    $region37: #{tpu_custom_call.1} parent=1 // pred_fallthru
      _
    // Predicated region
    $region38: #{tpu_custom_call.1} parent=1 // pred_check
      _
    $region39: #{tpu_custom_call.1} parent=1 // pred_check_branch
      %64 = sbr.rel (0) target = $region41
    $region40: #{tpu_custom_call.1} parent=1 // pred_region
      %65 = dma.done [#allocation6], 2048
    $region41: #{tpu_custom_call.1} parent=1 // pred_fallthru
      _
    %v66 = vld [vmem:[#allocation2] sm:$0xff]
    %v67 = vld [vmem:[#allocation5] sm:$0xff]
    %v68 = vld [vmem:[#allocation5 + $0x8] sm:$0xff]
    %v69 = vld [vmem:[#allocation5 + $0x10] sm:$0xff]
    %v70 = vld [vmem:[#allocation5 + $0x18] sm:$0xff]
    %v71 = vld [vmem:[#allocation5 + $0x20] sm:$0xff]
    %v72 = vld [vmem:[#allocation5 + $0x28] sm:$0xff]
    %v73 = vld [vmem:[#allocation5 + $0x30] sm:$0xff]
    %v74 = vld [vmem:[#allocation5 + $0x38] sm:$0xff]
    %v75 = vld [vmem:[#allocation5 + $0x40] sm:$0xff]
    %v76 = vld [vmem:[#allocation5 + $0x48] sm:$0xff]
    %v77 = vld [vmem:[#allocation5 + $0x50] sm:$0xff]
    %v78 = vld [vmem:[#allocation5 + $0x58] sm:$0xff]
    %v79 = vld [vmem:[#allocation5 + $0x60] sm:$0xff]
    %v80 = vld [vmem:[#allocation5 + $0x68] sm:$0xff]
    %v81 = vld [vmem:[#allocation5 + $0x70] sm:$0xff]
    %v82 = vld [vmem:[#allocation5 + $0x78] sm:$0xff]
    %v83 = vld [vmem:[%s2] sm:$0x1]
    %v85 = vlaneseq
    %v86 = vshrl.u32 %v85, 7
    %v87 = vsub.s32 0, %v86
    %v88 = vrot.slane %v83, %v87
    %90 = vmatprep.subr.mxu0 0.0
    %91 = vmatpush1.msra.mxu0 %v67
    %92 = vmatprep.subr.mxu0 0.0
    %93 = vmatpush1.msra.mxu0 %v68
    %94 = vmatprep.subr.mxu0 0.0
    %95 = vmatpush1.msra.mxu0 %v69
    %96 = vmatprep.subr.mxu0 0.0
    %97 = vmatpush1.msra.mxu0 %v70
    %98 = vmatprep.subr.mxu0 0.0
    %99 = vmatpush1.msra.mxu0 %v71
    %100 = vmatprep.subr.mxu0 0.0
    %101 = vmatpush1.msra.mxu0 %v72
    %102 = vmatprep.subr.mxu0 0.0
    %103 = vmatpush1.msra.mxu0 %v73
    %104 = vmatprep.subr.mxu0 0.0
    %105 = vmatpush1.msra.mxu0 %v74
    %106 = vmatprep.subr.mxu0 0.0
    %107 = vmatpush1.msra.mxu0 %v75
    %108 = vmatprep.subr.mxu0 0.0
    %109 = vmatpush1.msra.mxu0 %v76
    %110 = vmatprep.subr.mxu0 0.0
    %111 = vmatpush1.msra.mxu0 %v77
    %112 = vmatprep.subr.mxu0 0.0
    %113 = vmatpush1.msra.mxu0 %v78
    %114 = vmatprep.subr.mxu0 0.0
    %115 = vmatpush1.msra.mxu0 %v79
    %116 = vmatprep.subr.mxu0 0.0
    %117 = vmatpush1.msra.mxu0 %v80
    %118 = vmatprep.subr.mxu0 0.0
    %119 = vmatpush1.msra.mxu0 %v81
    %120 = vmatprep.subr.mxu0 0.0
    %121 = vmatpush1.msra.mxu0 %v82
    %122 = vmatprep.subr.mxu0 0.0
    %123 = vmatpush1.msra.mxu0 0.0
    %124 = vmatprep.subr.mxu0 0.0
    %125 = vmatpush1.msra.mxu0 0.0
    %126 = vmatprep.subr.mxu0 0.0
    %127 = vmatpush1.msra.mxu0 0.0
    %128 = vmatprep.subr.mxu0 0.0
    %129 = vmatpush1.msra.mxu0 0.0
    %130 = vmatprep.subr.mxu0 0.0
    %131 = vmatpush1.msra.mxu0 0.0
    %132 = vmatprep.subr.mxu0 0.0
    %133 = vmatpush1.msra.mxu0 0.0
    %134 = vmatprep.subr.mxu0 0.0
    %135 = vmatpush1.msra.mxu0 0.0
    %136 = vmatprep.subr.mxu0 0.0
    %137 = vmatpush1.msra.mxu0 0.0
    %138 = vmatprep.subr.mxu0 0.0
    %139 = vmatpush1.msra.mxu0 0.0
    %140 = vmatprep.subr.mxu0 0.0
    %141 = vmatpush1.msra.mxu0 0.0
    %142 = vmatprep.subr.mxu0 0.0
    %143 = vmatpush1.msra.mxu0 0.0
    %144 = vmatprep.subr.mxu0 0.0
    %145 = vmatpush1.msra.mxu0 0.0
    %146 = vmatprep.subr.mxu0 0.0
    %147 = vmatpush1.msra.mxu0 0.0
    %148 = vmatprep.subr.mxu0 0.0
    %149 = vmatpush1.msra.mxu0 0.0
    %150 = vmatprep.subr.mxu0 0.0
    %151 = vmatpush1.msra.mxu0 0.0
    %152 = vmatprep.subr.mxu0 0.0
    %153 = vmatpush1.msra.mxu0 0.0
    %154 = vmatprep.mubr.f32.mxu0 0.0
    %155 = vmatmul.mubr.f32.gmra.mrb[0].mxu0 %v66
    %v156 = vpop.f32.mrb[0].mxu0
    %v157 = vadd.f32 %v88, %v156
    %v158 = vpop.f32.mrb[0].mxu0
    %159 = vdwg.mxu0
    %v160 = vmax.f32 %v157, 0.0
    %v161 = vrot.slane %v160, 4
    %v162 = vadd.f32 %v160, %v161
    %v163 = vrot.slane %v162, 2
    %v164 = vadd.f32 %v162, %v163
    %v165 = vrot.slane %v164, 1
    %v166 = vadd.f32 %v164, %v165
    %v167 = vmul.f32 %v166, 0.125
    %v168 = vsub.f32 %v160, %v167
    %v169 = vmul.f32 %v168, %v168
    %v170 = vrot.slane %v169, 4
    %v171 = vadd.f32 %v169, %v170
    %v172 = vrot.slane %v171, 2
    %v173 = vadd.f32 %v171, %v172
    %v174 = vrot.slane %v173, 1
    %v175 = vadd.f32 %v173, %v174
    %v176 = vmul.f32 %v175, 0.125
    %v177 = vld [vmem:[%s3] sm:$0x1]
    %v178 = vadd.f32 %v176, 1e-05
    %v179 = vrsqrt.pop %v178
    %v180 = vmul.f32 %v177, %v179
    %v181 = vld [vmem:[%s4] sm:$0x1]
    %v182 = vmul.f32 %v167, %v180
    %v183 = vsub.f32 %v181, %v182
    %v185 = vlaneseq
    %v186 = vshrl.u32 %v185, 7
    %v187 = vsub.s32 0, %v186
    %v188 = vrot.slane %v180, %v187
    %v190 = vmul.f32 %v160, %v188
    %v192 = vlaneseq
    %v193 = vshrl.u32 %v192, 7
    %v194 = vsub.s32 0, %v193
    %v195 = vrot.slane %v183, %v194
    %v197 = vadd.f32 %v190, %v195
    %v198 = vld [vmem:[#allocation7] sm:$0xff]
    %v199 = vld [vmem:[#allocation7 + $0x8] sm:$0xff]
    %v200 = vld [vmem:[#allocation7 + $0x10] sm:$0xff]
    %v201 = vld [vmem:[#allocation7 + $0x18] sm:$0xff]
    %v202 = vld [vmem:[#allocation7 + $0x20] sm:$0xff]
    %v203 = vld [vmem:[#allocation7 + $0x28] sm:$0xff]
    %v204 = vld [vmem:[#allocation7 + $0x30] sm:$0xff]
    %v205 = vld [vmem:[#allocation7 + $0x38] sm:$0xff]
    %v206 = vld [vmem:[#allocation7 + $0x40] sm:$0xff]
    %v207 = vld [vmem:[#allocation7 + $0x48] sm:$0xff]
    %v208 = vld [vmem:[#allocation7 + $0x50] sm:$0xff]
    %v209 = vld [vmem:[#allocation7 + $0x58] sm:$0xff]
    %v210 = vld [vmem:[#allocation7 + $0x60] sm:$0xff]
    %v211 = vld [vmem:[#allocation7 + $0x68] sm:$0xff]
    %v212 = vld [vmem:[#allocation7 + $0x70] sm:$0xff]
    %v213 = vld [vmem:[#allocation7 + $0x78] sm:$0xff]
    %v214 = vld [vmem:[%s6] sm:$0x1]
    %v216 = vlaneseq
    %v217 = vshrl.u32 %v216, 7
    %v218 = vsub.s32 0, %v217
    %v219 = vrot.slane %v214, %v218
    %221 = vmatprep.subr.mxu0 0.0
    %222 = vmatpush1.msra.mxu0 %v198
    %223 = vmatprep.subr.mxu0 0.0
    %224 = vmatpush1.msra.mxu0 %v199
    %225 = vmatprep.subr.mxu0 0.0
    %226 = vmatpush1.msra.mxu0 %v200
    %227 = vmatprep.subr.mxu0 0.0
    %228 = vmatpush1.msra.mxu0 %v201
    %229 = vmatprep.subr.mxu0 0.0
    %230 = vmatpush1.msra.mxu0 %v202
    %231 = vmatprep.subr.mxu0 0.0
    %232 = vmatpush1.msra.mxu0 %v203
    %233 = vmatprep.subr.mxu0 0.0
    %234 = vmatpush1.msra.mxu0 %v204
    %235 = vmatprep.subr.mxu0 0.0
    %236 = vmatpush1.msra.mxu0 %v205
    %237 = vmatprep.subr.mxu0 0.0
    %238 = vmatpush1.msra.mxu0 %v206
    %239 = vmatprep.subr.mxu0 0.0
    %240 = vmatpush1.msra.mxu0 %v207
    %241 = vmatprep.subr.mxu0 0.0
    %242 = vmatpush1.msra.mxu0 %v208
    %243 = vmatprep.subr.mxu0 0.0
    %244 = vmatpush1.msra.mxu0 %v209
    %245 = vmatprep.subr.mxu0 0.0
    %246 = vmatpush1.msra.mxu0 %v210
    %247 = vmatprep.subr.mxu0 0.0
    %248 = vmatpush1.msra.mxu0 %v211
    %249 = vmatprep.subr.mxu0 0.0
    %250 = vmatpush1.msra.mxu0 %v212
    %251 = vmatprep.subr.mxu0 0.0
    %252 = vmatpush1.msra.mxu0 %v213
    %253 = vmatprep.subr.mxu0 0.0
    %254 = vmatpush1.msra.mxu0 0.0
    %255 = vmatprep.subr.mxu0 0.0
    %256 = vmatpush1.msra.mxu0 0.0
    %257 = vmatprep.subr.mxu0 0.0
    %258 = vmatpush1.msra.mxu0 0.0
    %259 = vmatprep.subr.mxu0 0.0
    %260 = vmatpush1.msra.mxu0 0.0
    %261 = vmatprep.subr.mxu0 0.0
    %262 = vmatpush1.msra.mxu0 0.0
    %263 = vmatprep.subr.mxu0 0.0
    %264 = vmatpush1.msra.mxu0 0.0
    %265 = vmatprep.subr.mxu0 0.0
    %266 = vmatpush1.msra.mxu0 0.0
    %267 = vmatprep.subr.mxu0 0.0
    %268 = vmatpush1.msra.mxu0 0.0
    %269 = vmatprep.subr.mxu0 0.0
    %270 = vmatpush1.msra.mxu0 0.0
    %271 = vmatprep.subr.mxu0 0.0
    %272 = vmatpush1.msra.mxu0 0.0
    %273 = vmatprep.subr.mxu0 0.0
    %274 = vmatpush1.msra.mxu0 0.0
    %275 = vmatprep.subr.mxu0 0.0
    %276 = vmatpush1.msra.mxu0 0.0
    %277 = vmatprep.subr.mxu0 0.0
    %278 = vmatpush1.msra.mxu0 0.0
    %279 = vmatprep.subr.mxu0 0.0
    %280 = vmatpush1.msra.mxu0 0.0
    %281 = vmatprep.subr.mxu0 0.0
    %282 = vmatpush1.msra.mxu0 0.0
    %283 = vmatprep.subr.mxu0 0.0
    %284 = vmatpush1.msra.mxu0 0.0
    %285 = vmatprep.mubr.f32.mxu0 0.0
    %286 = vmatmul.mubr.f32.gmra.mrb[0].mxu0 %v197
    %v287 = vpop.f32.mrb[0].mxu0
    %v288 = vadd.f32 %v219, %v287
    %v289 = vpop.f32.mrb[0].mxu0
    %290 = vdwg.mxu0
    %v291 = vadd.f32 %v66, %v288
    %v292 = vmax.f32 %v291, 0.0
    %293 = vst [vmem:[#allocation8] sm:$0xff] %v292
    // Predicated region
    $region42: #{tpu_custom_call.1} parent=1 // pred_check
      _
    $region43: #{tpu_custom_call.1} parent=1 // pred_check_branch
      %295 = sbr.rel (0) target = $region45
    $region44: #{tpu_custom_call.1} parent=1 // pred_region
      %s297 = ssub.s32 128, 128
      %298 = vsyncadd [#allocation4], %s297
      %s300 = sshll.u32 [#allocation8], 4
      %s301 = int_to_ptr.vmem [resolvable:$true] %s300
      %303 = dma.vmem_to_hbm [thread:$0]  %s301, 128, %s7, [#allocation4]
    $region45: #{tpu_custom_call.1} parent=1 // pred_fallthru
      _
    // Predicated region
    $region46: #{tpu_custom_call.1} parent=1 // pred_check
      _
    $region47: #{tpu_custom_call.1} parent=1 // pred_check_branch
      %305 = sbr.rel (0) target = $region49
    $region48: #{tpu_custom_call.1} parent=1 // pred_region
      %306 = dma.done [#allocation4], 128
    $region49: #{tpu_custom_call.1} parent=1 // pred_fallthru
      _
    %307 = vsyncpa [#allocation3], 1
    %308 = vsyncpa [#allocation6], 1
    %309 = vsyncpa [#allocation4], 1

</llo_original>
